<compile_context>
chip_gen: v7x
topology: tpu7x:2x2x1
jax: 0.10.0
libtpu: 0.0.40
codegen_flags: <defaults>
</compile_context>

<pallas_src>
import functools

import jax
import jax.numpy as jnp
from jax.experimental import pallas as pl
from jax.experimental.pallas import tpu as pltpu


def _largest_divisor_at_most(n, cap):
    cap = max(1, min(n, cap))
    for d in range(cap, 0, -1):
        if n % d == 0:
            return d
    return 1


def _budgets():
    """(per-step input block budget bytes, vmem_limit_bytes), gen-aware."""
    try:
        cap = getattr(pltpu.get_tpu_info(), "vmem_capacity_bytes", 64 << 20)
    except Exception:  # pragma: no cover - conservative fallback
        cap = 64 << 20
    if cap <= (64 << 20):            # v7x-class: 64 MiB physical VMEM
        return 6 << 20, 28 << 20
    return 10 << 20, 48 << 20        # v5e / v6e: 128 MiB physical VMEM


def _pick_tiles(B, C, H, W, itemsize, block_budget_bytes):
    """Returns (tb, tc, c_pad).  c_pad > C means wrapper pads channels."""
    hw = H * W
    # tb: just enough to amortise the per-step/epilogue overhead; growth goes
    # into tc.  Cap so grid[0] >= 2 when B >= 2 (two v7x TensorCores).
    tb_cap = max(1, 4096 // hw)
    if B >= 2:
        tb_cap = min(tb_cap, B // 2)
    tb = _largest_divisor_at_most(B, tb_cap)

    budget_elems = max(1, block_budget_bytes // itemsize)
    tc_cap = max(1, budget_elems // (tb * hw))
    if C <= tc_cap:
        return tb, C, C                       # full channel extent, no padding
    if C % 8 == 0:
        tc = 8 * _largest_divisor_at_most(C // 8, max(1, tc_cap // 8))
        return tb, tc, C
    # C not a multiple of 8 and larger than the budget: pad channels so the
    # block's second-to-last dim can be a multiple of 8 within the budget.
    tc = 8 * max(1, tc_cap // 8)
    c_pad = ((C + tc - 1) // tc) * tc
    return tb, tc, c_pad


def _spatial_attention_kernel(w_ref, x_ref, o_ref, sum_ref, max_ref, *,
                              C, H, W, needs_mask):
    # w_ref  : SMEM (18,) f32 conv weight, layout [in_c(avg,max)=2, kh=3, kw=3]
    # x_ref  : VMEM (tb, tc, H*W) input block
    # o_ref  : VMEM (tb, H*W)  sigmoid(conv([avg, max]))  (channel dim squeezed)
    # sum_ref / max_ref : VMEM (tb, H*W) f32 running channel sum / max
    c_step = pl.program_id(1)
    hw = H * W

    blk = x_ref[...]                                           # (tb, tc, hw)
    # f32 accumulation without materialising an f32 copy of the block.
    part_sum = jnp.sum(blk, axis=1, dtype=jnp.float32)         # (tb, hw)
    if needs_mask:
        tc = blk.shape[1]
        ch = c_step * tc + jax.lax.broadcasted_iota(jnp.int32, blk.shape, 1)
        blk_m = jnp.where(ch < C, blk, jnp.asarray(-jnp.inf, blk.dtype))
        part_max = jnp.max(blk_m, axis=1).astype(jnp.float32)
    else:
        part_max = jnp.max(blk, axis=1).astype(jnp.float32)

    @pl.when(c_step == 0)
    def _():
        sum_ref[...] = part_sum
        max_ref[...] = part_max

    @pl.when(c_step > 0)
    def _():
        sum_ref[...] = sum_ref[...] + part_sum
        max_ref[...] = jnp.maximum(max_ref[...], part_max)

    @pl.when(c_step == pl.num_programs(1) - 1)
    def _():
        tb = sum_ref.shape[0]
        avg = sum_ref[...] * (1.0 / C)                         # channel mean
        mx = max_ref[...]                                      # channel max

        # Flattened-row (lane) position and its column index.
        p = jax.lax.broadcasted_iota(jnp.int32, (tb, hw), 1)
        col = p % W

        # 3x3 SAME conv via lane rolls (XLU) + boundary masks; column (dw)
        # shifts are recomputed per dh to keep the epilogue live set small.
        acc = jnp.zeros((tb, hw), jnp.float32)
        for dh in (-1, 0, 1):
            kh = dh + 1
            h = jnp.zeros((tb, hw), jnp.float32)
            for ci, f in enumerate((avg, mx)):
                for dw in (-1, 0, 1):
                    kw = dw + 1
                    if dw == 0:
                        g = f
                    else:
                        g = pltpu.roll(f, shift=(-dw) % hw, axis=1)
                        ok = (col >= 1) if dw == -1 else (col <= W - 2)
                        g = jnp.where(ok, g, 0.0)
                    h = h + w_ref[ci * 9 + kh * 3 + kw] * g
            if dh != 0:
                h = pltpu.roll(h, shift=(-dh * W) % hw, axis=1)
                row_ok = (p >= W) if dh == -1 else (p < (H - 1) * W)
                h = jnp.where(row_ok, h, 0.0)
            acc = acc + h

        o_ref[...] = jax.nn.sigmoid(acc).astype(o_ref.dtype)


def spatial_attention(x, weight):
    """x: (B, C, H, W); weight: (1, 2, 3, 3) Conv2d(2, 1, 3, bias=False) weight."""
    B, C, H, W = x.shape
    hw = H * W
    x_flat = x.reshape(B, C, hw)                         # free metadata reshape
    w_flat = weight.reshape(-1).astype(jnp.float32)      # (18,)

    block_budget, vmem_limit = _budgets()
    tb, tc, c_pad = _pick_tiles(B, C, H, W, x.dtype.itemsize, block_budget)
    needs_mask = c_pad != C
    if needs_mask:
        # Zero padding is exact for the sum; max is masked in-kernel.
        x_flat = jnp.pad(x_flat, ((0, 0), (0, c_pad - C), (0, 0)))
    grid = (B // tb, c_pad // tc)

    kernel = functools.partial(_spatial_attention_kernel,
                               C=C, H=H, W=W, needs_mask=needs_mask)

    out = pl.pallas_call(
        kernel,
        out_shape=jax.ShapeDtypeStruct((B, 1, hw), x.dtype),
        grid_spec=pltpu.PrefetchScalarGridSpec(
            num_scalar_prefetch=0,
            grid=grid,
            in_specs=[
                pl.BlockSpec(memory_space=pltpu.MemorySpace.SMEM),
                pl.BlockSpec((tb, tc, hw), lambda b, c: (b, c, 0)),
            ],
            out_specs=pl.BlockSpec((tb, pl.Squeezed(), hw),
                                   lambda b, c: (b, 0, 0)),
            scratch_shapes=[pltpu.VMEM((tb, hw), jnp.float32),
                            pltpu.VMEM((tb, hw), jnp.float32)],
        ),
        compiler_params=pltpu.CompilerParams(
            dimension_semantics=("parallel", "arbitrary"),
            vmem_limit_bytes=vmem_limit),
        cost_estimate=pl.CostEstimate(
            flops=2 * B * c_pad * hw + 36 * B * hw,
            transcendentals=B * hw,
            bytes_accessed=(B * c_pad * hw * x.dtype.itemsize
                            + B * hw * x.dtype.itemsize + 18 * 4)),
    )(w_flat, x_flat)

    return out.reshape(B, 1, H, W)


def spatial_attention_reference(x, weight):
    # Pure-JAX reference matching the PyTorch module.
    avg = jnp.mean(x, axis=1, keepdims=True)
    mx = jnp.max(x, axis=1, keepdims=True)
    feat = jnp.concatenate([avg, mx], axis=1)
    y = jax.lax.conv_general_dilated(
        feat, weight, window_strides=(1, 1), padding="SAME",
        dimension_numbers=("NCHW", "OIHW", "NCHW"))
    return jax.nn.sigmoid(y)


if __name__ == "__main__":
    key = jax.random.PRNGKey(0)
    kx, kw = jax.random.split(key)

    B, C, H, W = 2, 4, 16, 16
    x = jax.random.normal(kx, (B, C, H, W), dtype=jnp.float32)
    # Deterministic synthetic conv weight: Conv2d(2, 1, 3, bias=False) -> (1, 2, 3, 3)
    weight = jax.random.normal(kw, (1, 2, 3, 3), dtype=jnp.float32) * 0.3

    out = jax.block_until_ready(spatial_attention(x, weight))
    ref = spatial_attention_reference(x, weight)

    assert out.shape == (B, 1, H, W), out.shape
    err = float(jnp.max(jnp.abs(out - ref)))
    assert err < 1e-5, err

    print("KERNEL_OK")
</pallas_src>

<mosaic_0001>
module attributes {stable_mosaic.version = 11 : i64} {
  func.func @_spatial_attention_kernel(%arg0: i32, %arg1: i32, %arg2: memref<18xf32, #tpu.memory_space<smem>>, %arg3: memref<1x4x256xf32, #tpu.memory_space<vmem>>, %arg4: memref<1x1x256xf32, #tpu.memory_space<vmem>>, %arg5: memref<1x256xf32, #tpu.memory_space<vmem>>, %arg6: memref<1x256xf32, #tpu.memory_space<vmem>>) attributes {dimension_semantics = [#tpu.dimension_semantics<parallel>, #tpu.dimension_semantics<arbitrary>], iteration_bounds = array<i64: 2, 1>, scalar_prefetch = 0 : i64, scratch_operands = 2 : i64, tpu.core_type = #tpu.core_type<tc>, window_params = [{transform_indices = @transform_0, window_bounds = array<i64: 18>}, {transform_indices = @transform_1, window_bounds = array<i64: 1, 4, 256>}, {transform_indices = @transform_2, window_bounds = array<i64: 1, 1, 256>}]} {
    %c0 = arith.constant 0 : index
    %c0_0 = arith.constant 0 : index
    %c0_1 = arith.constant 0 : index
    %0 = vector.load %arg3[%c0, %c0_0, %c0_1] : memref<1x4x256xf32, #tpu.memory_space<vmem>>, vector<1x4x256xf32>
    %cst = arith.constant dense<0.000000e+00> : vector<1x256xf32>
    %1 = vector.multi_reduction <add>, %0, %cst [1] : vector<1x4x256xf32> to vector<1x256xf32>
    %cst_2 = arith.constant dense<0xFF800000> : vector<1x256xf32>
    %2 = vector.multi_reduction <maximumf>, %0, %cst_2 [1] : vector<1x4x256xf32> to vector<1x256xf32>
    %c0_i32 = arith.constant 0 : i32
    %3 = arith.cmpi eq, %arg1, %c0_i32 : i32
    %4 = arith.extui %3 : i1 to i32
    %c0_i32_3 = arith.constant 0 : i32
    %5 = arith.cmpi ne, %4, %c0_i32_3 : i32
    scf.if %5 {
      %c0_8 = arith.constant 0 : index
      %c0_9 = arith.constant 0 : index
      %12 = vector.load %arg5[%c0_8, %c0_9] : memref<1x256xf32, #tpu.memory_space<vmem>>, vector<1x256xf32>
      tpu.vector_store %arg5[%c0_8, %c0_9], %1 {strides = array<i32>} : memref<1x256xf32, #tpu.memory_space<vmem>>, vector<1x256xf32>,
      %c0_10 = arith.constant 0 : index
      %c0_11 = arith.constant 0 : index
      %13 = vector.load %arg6[%c0_10, %c0_11] : memref<1x256xf32, #tpu.memory_space<vmem>>, vector<1x256xf32>
      tpu.vector_store %arg6[%c0_10, %c0_11], %2 {strides = array<i32>} : memref<1x256xf32, #tpu.memory_space<vmem>>, vector<1x256xf32>,
    } else {
    }
    %c0_i32_4 = arith.constant 0 : i32
    %6 = arith.cmpi sgt, %arg1, %c0_i32_4 : i32
    %7 = arith.extui %6 : i1 to i32
    %c0_i32_5 = arith.constant 0 : i32
    %8 = arith.cmpi ne, %7, %c0_i32_5 : i32
    scf.if %8 {
      %c0_8 = arith.constant 0 : index
      %c0_9 = arith.constant 0 : index
      %12 = vector.load %arg5[%c0_8, %c0_9] : memref<1x256xf32, #tpu.memory_space<vmem>>, vector<1x256xf32>
      %13 = arith.addf %12, %1 : vector<1x256xf32>
      %c0_10 = arith.constant 0 : index
      %c0_11 = arith.constant 0 : index
      %14 = vector.load %arg5[%c0_10, %c0_11] : memref<1x256xf32, #tpu.memory_space<vmem>>, vector<1x256xf32>
      tpu.vector_store %arg5[%c0_10, %c0_11], %13 {strides = array<i32>} : memref<1x256xf32, #tpu.memory_space<vmem>>, vector<1x256xf32>,
      %c0_12 = arith.constant 0 : index
      %c0_13 = arith.constant 0 : index
      %15 = vector.load %arg6[%c0_12, %c0_13] : memref<1x256xf32, #tpu.memory_space<vmem>>, vector<1x256xf32>
      %16 = arith.maximumf %15, %2 : vector<1x256xf32>
      %c0_14 = arith.constant 0 : index
      %c0_15 = arith.constant 0 : index
      %17 = vector.load %arg6[%c0_14, %c0_15] : memref<1x256xf32, #tpu.memory_space<vmem>>, vector<1x256xf32>
      tpu.vector_store %arg6[%c0_14, %c0_15], %16 {strides = array<i32>} : memref<1x256xf32, #tpu.memory_space<vmem>>, vector<1x256xf32>,
    } else {
    }
    %c0_i32_6 = arith.constant 0 : i32
    %9 = arith.cmpi eq, %arg1, %c0_i32_6 : i32
    %10 = arith.extui %9 : i1 to i32
    %c0_i32_7 = arith.constant 0 : i32
    %11 = arith.cmpi ne, %10, %c0_i32_7 : i32
    scf.if %11 {
      %c0_8 = arith.constant 0 : index
      %c0_9 = arith.constant 0 : index
      %12 = vector.load %arg5[%c0_8, %c0_9] : memref<1x256xf32, #tpu.memory_space<vmem>>, vector<1x256xf32>
      %cst_10 = arith.constant 2.500000e-01 : f32
      %13 = vector.broadcast %cst_10 : f32 to vector<1x256xf32>
      %14 = arith.mulf %12, %13 : vector<1x256xf32>
      %c0_11 = arith.constant 0 : index
      %c0_12 = arith.constant 0 : index
      %15 = vector.load %arg6[%c0_11, %c0_12] : memref<1x256xf32, #tpu.memory_space<vmem>>, vector<1x256xf32>
      %16 = tpu.iota {dimensions = array<i32: 1>} : vector<1x256xi32>
      %c16_i32 = arith.constant 16 : i32
      %c0_i32_13 = arith.constant 0 : i32
      %17 = arith.cmpi eq, %c16_i32, %c0_i32_13 : i32
      %c1_i32 = arith.constant 1 : i32
      %18 = arith.select %17, %c1_i32, %c16_i32 : i32
      %19 = vector.broadcast %18 : i32 to vector<1x256xi32>
      %20 = arith.remsi %16, %19 : vector<1x256xi32>
      %c0_i32_14 = arith.constant 0 : i32
      %21 = vector.broadcast %c0_i32_14 : i32 to vector<1x256xi32>
      %22 = arith.cmpi ne, %20, %21 : vector<1x256xi32>
      %c0_i32_15 = arith.constant 0 : i32
      %23 = vector.broadcast %c0_i32_15 : i32 to vector<1x256xi32>
      %24 = arith.cmpi slt, %20, %23 : vector<1x256xi32>
      %c0_i32_16 = arith.constant 0 : i32
      %25 = arith.cmpi slt, %18, %c0_i32_16 : i32
      %26 = vector.broadcast %25 : i1 to vector<1x256xi1>
      %27 = vector.broadcast %26 : vector<1x256xi1> to vector<1x256xi1>
      %28 = arith.xori %24, %27 : vector<1x256xi1>
      %29 = arith.andi %28, %22 : vector<1x256xi1>
      %30 = vector.broadcast %18 : i32 to vector<1x256xi32>
      %31 = arith.addi %20, %30 : vector<1x256xi32>
      %32 = arith.select %29, %31, %20 : vector<1x256xi1>, vector<1x256xi32>
      %cst_17 = arith.constant 0.000000e+00 : f32
      %33 = vector.broadcast %cst_17 : f32 to vector<1x256xf32>
      %cst_18 = arith.constant 0.000000e+00 : f32
      %34 = vector.broadcast %cst_18 : f32 to vector<1x256xf32>
      %c1_i32_19 = arith.constant 1 : i32
      %35 = tpu.dynamic_rotate %14 by %c1_i32_19 dim 1 : vector<1x256xf32>, i32 -> vector<1x256xf32>
      %c1_i32_20 = arith.constant 1 : i32
      %36 = vector.broadcast %c1_i32_20 : i32 to vector<1x256xi32>
      %37 = arith.cmpi sge, %32, %36 : vector<1x256xi32>
      %cst_21 = arith.constant 0.000000e+00 : f32
      %38 = vector.broadcast %cst_21 : f32 to vector<1x256xf32>
      %39 = arith.select %37, %35, %38 : vector<1x256xi1>, vector<1x256xf32>
      %c0_22 = arith.constant 0 : index
      %40 = memref.load %arg2[%c0_22] : memref<18xf32, #tpu.memory_space<smem>>
      %41 = vector.broadcast %40 : f32 to vector<1x256xf32>
      %42 = arith.mulf %41, %39 : vector<1x256xf32>
      %43 = arith.addf %34, %42 : vector<1x256xf32>
      %c1 = arith.constant 1 : index
      %44 = memref.load %arg2[%c1] : memref<18xf32, #tpu.memory_space<smem>>
      %45 = vector.broadcast %44 : f32 to vector<1x256xf32>
      %46 = arith.mulf %45, %14 : vector<1x256xf32>
      %47 = arith.addf %43, %46 : vector<1x256xf32>
      %c255_i32 = arith.constant 255 : i32
      %48 = tpu.dynamic_rotate %14 by %c255_i32 dim 1 : vector<1x256xf32>, i32 -> vector<1x256xf32>
      %c14_i32 = arith.constant 14 : i32
      %49 = vector.broadcast %c14_i32 : i32 to vector<1x256xi32>
      %50 = arith.cmpi sle, %32, %49 : vector<1x256xi32>
      %cst_23 = arith.constant 0.000000e+00 : f32
      %51 = vector.broadcast %cst_23 : f32 to vector<1x256xf32>
      %52 = arith.select %50, %48, %51 : vector<1x256xi1>, vector<1x256xf32>
      %c2 = arith.constant 2 : index
      %53 = memref.load %arg2[%c2] : memref<18xf32, #tpu.memory_space<smem>>
      %54 = vector.broadcast %53 : f32 to vector<1x256xf32>
      %55 = arith.mulf %54, %52 : vector<1x256xf32>
      %56 = arith.addf %47, %55 : vector<1x256xf32>
      %c1_i32_24 = arith.constant 1 : i32
      %57 = tpu.dynamic_rotate %15 by %c1_i32_24 dim 1 : vector<1x256xf32>, i32 -> vector<1x256xf32>
      %c1_i32_25 = arith.constant 1 : i32
      %58 = vector.broadcast %c1_i32_25 : i32 to vector<1x256xi32>
      %59 = arith.cmpi sge, %32, %58 : vector<1x256xi32>
      %cst_26 = arith.constant 0.000000e+00 : f32
      %60 = vector.broadcast %cst_26 : f32 to vector<1x256xf32>
      %61 = arith.select %59, %57, %60 : vector<1x256xi1>, vector<1x256xf32>
      %c9 = arith.constant 9 : index
      %62 = memref.load %arg2[%c9] : memref<18xf32, #tpu.memory_space<smem>>
      %63 = vector.broadcast %62 : f32 to vector<1x256xf32>
      %64 = arith.mulf %63, %61 : vector<1x256xf32>
      %65 = arith.addf %56, %64 : vector<1x256xf32>
      %c10 = arith.constant 10 : index
      %66 = memref.load %arg2[%c10] : memref<18xf32, #tpu.memory_space<smem>>
      %67 = vector.broadcast %66 : f32 to vector<1x256xf32>
      %68 = arith.mulf %67, %15 : vector<1x256xf32>
      %69 = arith.addf %65, %68 : vector<1x256xf32>
      %c255_i32_27 = arith.constant 255 : i32
      %70 = tpu.dynamic_rotate %15 by %c255_i32_27 dim 1 : vector<1x256xf32>, i32 -> vector<1x256xf32>
      %c14_i32_28 = arith.constant 14 : i32
      %71 = vector.broadcast %c14_i32_28 : i32 to vector<1x256xi32>
      %72 = arith.cmpi sle, %32, %71 : vector<1x256xi32>
      %cst_29 = arith.constant 0.000000e+00 : f32
      %73 = vector.broadcast %cst_29 : f32 to vector<1x256xf32>
      %74 = arith.select %72, %70, %73 : vector<1x256xi1>, vector<1x256xf32>
      %c11 = arith.constant 11 : index
      %75 = memref.load %arg2[%c11] : memref<18xf32, #tpu.memory_space<smem>>
      %76 = vector.broadcast %75 : f32 to vector<1x256xf32>
      %77 = arith.mulf %76, %74 : vector<1x256xf32>
      %78 = arith.addf %69, %77 : vector<1x256xf32>
      %c16_i32_30 = arith.constant 16 : i32
      %79 = tpu.dynamic_rotate %78 by %c16_i32_30 dim 1 : vector<1x256xf32>, i32 -> vector<1x256xf32>
      %c16_i32_31 = arith.constant 16 : i32
      %80 = vector.broadcast %c16_i32_31 : i32 to vector<1x256xi32>
      %81 = arith.cmpi sge, %16, %80 : vector<1x256xi32>
      %cst_32 = arith.constant 0.000000e+00 : f32
      %82 = vector.broadcast %cst_32 : f32 to vector<1x256xf32>
      %83 = arith.select %81, %79, %82 : vector<1x256xi1>, vector<1x256xf32>
      %84 = arith.addf %33, %83 : vector<1x256xf32>
      %cst_33 = arith.constant 0.000000e+00 : f32
      %85 = vector.broadcast %cst_33 : f32 to vector<1x256xf32>
      %c1_i32_34 = arith.constant 1 : i32
      %86 = tpu.dynamic_rotate %14 by %c1_i32_34 dim 1 : vector<1x256xf32>, i32 -> vector<1x256xf32>
      %c1_i32_35 = arith.constant 1 : i32
      %87 = vector.broadcast %c1_i32_35 : i32 to vector<1x256xi32>
      %88 = arith.cmpi sge, %32, %87 : vector<1x256xi32>
      %cst_36 = arith.constant 0.000000e+00 : f32
      %89 = vector.broadcast %cst_36 : f32 to vector<1x256xf32>
      %90 = arith.select %88, %86, %89 : vector<1x256xi1>, vector<1x256xf32>
      %c3 = arith.constant 3 : index
      %91 = memref.load %arg2[%c3] : memref<18xf32, #tpu.memory_space<smem>>
      %92 = vector.broadcast %91 : f32 to vector<1x256xf32>
      %93 = arith.mulf %92, %90 : vector<1x256xf32>
      %94 = arith.addf %85, %93 : vector<1x256xf32>
      %c4 = arith.constant 4 : index
      %95 = memref.load %arg2[%c4] : memref<18xf32, #tpu.memory_space<smem>>
      %96 = vector.broadcast %95 : f32 to vector<1x256xf32>
      %97 = arith.mulf %96, %14 : vector<1x256xf32>
      %98 = arith.addf %94, %97 : vector<1x256xf32>
      %c255_i32_37 = arith.constant 255 : i32
      %99 = tpu.dynamic_rotate %14 by %c255_i32_37 dim 1 : vector<1x256xf32>, i32 -> vector<1x256xf32>
      %c14_i32_38 = arith.constant 14 : i32
      %100 = vector.broadcast %c14_i32_38 : i32 to vector<1x256xi32>
      %101 = arith.cmpi sle, %32, %100 : vector<1x256xi32>
      %cst_39 = arith.constant 0.000000e+00 : f32
      %102 = vector.broadcast %cst_39 : f32 to vector<1x256xf32>
      %103 = arith.select %101, %99, %102 : vector<1x256xi1>, vector<1x256xf32>
      %c5 = arith.constant 5 : index
      %104 = memref.load %arg2[%c5] : memref<18xf32, #tpu.memory_space<smem>>
      %105 = vector.broadcast %104 : f32 to vector<1x256xf32>
      %106 = arith.mulf %105, %103 : vector<1x256xf32>
      %107 = arith.addf %98, %106 : vector<1x256xf32>
      %c1_i32_40 = arith.constant 1 : i32
      %108 = tpu.dynamic_rotate %15 by %c1_i32_40 dim 1 : vector<1x256xf32>, i32 -> vector<1x256xf32>
      %c1_i32_41 = arith.constant 1 : i32
      %109 = vector.broadcast %c1_i32_41 : i32 to vector<1x256xi32>
      %110 = arith.cmpi sge, %32, %109 : vector<1x256xi32>
      %cst_42 = arith.constant 0.000000e+00 : f32
      %111 = vector.broadcast %cst_42 : f32 to vector<1x256xf32>
      %112 = arith.select %110, %108, %111 : vector<1x256xi1>, vector<1x256xf32>
      %c12 = arith.constant 12 : index
      %113 = memref.load %arg2[%c12] : memref<18xf32, #tpu.memory_space<smem>>
      %114 = vector.broadcast %113 : f32 to vector<1x256xf32>
      %115 = arith.mulf %114, %112 : vector<1x256xf32>
      %116 = arith.addf %107, %115 : vector<1x256xf32>
      %c13 = arith.constant 13 : index
      %117 = memref.load %arg2[%c13] : memref<18xf32, #tpu.memory_space<smem>>
      %118 = vector.broadcast %117 : f32 to vector<1x256xf32>
      %119 = arith.mulf %118, %15 : vector<1x256xf32>
      %120 = arith.addf %116, %119 : vector<1x256xf32>
      %c255_i32_43 = arith.constant 255 : i32
      %121 = tpu.dynamic_rotate %15 by %c255_i32_43 dim 1 : vector<1x256xf32>, i32 -> vector<1x256xf32>
      %c14_i32_44 = arith.constant 14 : i32
      %122 = vector.broadcast %c14_i32_44 : i32 to vector<1x256xi32>
      %123 = arith.cmpi sle, %32, %122 : vector<1x256xi32>
      %cst_45 = arith.constant 0.000000e+00 : f32
      %124 = vector.broadcast %cst_45 : f32 to vector<1x256xf32>
      %125 = arith.select %123, %121, %124 : vector<1x256xi1>, vector<1x256xf32>
      %c14 = arith.constant 14 : index
      %126 = memref.load %arg2[%c14] : memref<18xf32, #tpu.memory_space<smem>>
      %127 = vector.broadcast %126 : f32 to vector<1x256xf32>
      %128 = arith.mulf %127, %125 : vector<1x256xf32>
      %129 = arith.addf %120, %128 : vector<1x256xf32>
      %130 = arith.addf %84, %129 : vector<1x256xf32>
      %cst_46 = arith.constant 0.000000e+00 : f32
      %131 = vector.broadcast %cst_46 : f32 to vector<1x256xf32>
      %c1_i32_47 = arith.constant 1 : i32
      %132 = tpu.dynamic_rotate %14 by %c1_i32_47 dim 1 : vector<1x256xf32>, i32 -> vector<1x256xf32>
      %c1_i32_48 = arith.constant 1 : i32
      %133 = vector.broadcast %c1_i32_48 : i32 to vector<1x256xi32>
      %134 = arith.cmpi sge, %32, %133 : vector<1x256xi32>
      %cst_49 = arith.constant 0.000000e+00 : f32
      %135 = vector.broadcast %cst_49 : f32 to vector<1x256xf32>
      %136 = arith.select %134, %132, %135 : vector<1x256xi1>, vector<1x256xf32>
      %c6 = arith.constant 6 : index
      %137 = memref.load %arg2[%c6] : memref<18xf32, #tpu.memory_space<smem>>
      %138 = vector.broadcast %137 : f32 to vector<1x256xf32>
      %139 = arith.mulf %138, %136 : vector<1x256xf32>
      %140 = arith.addf %131, %139 : vector<1x256xf32>
      %c7 = arith.constant 7 : index
      %141 = memref.load %arg2[%c7] : memref<18xf32, #tpu.memory_space<smem>>
      %142 = vector.broadcast %141 : f32 to vector<1x256xf32>
      %143 = arith.mulf %142, %14 : vector<1x256xf32>
      %144 = arith.addf %140, %143 : vector<1x256xf32>
      %c255_i32_50 = arith.constant 255 : i32
      %145 = tpu.dynamic_rotate %14 by %c255_i32_50 dim 1 : vector<1x256xf32>, i32 -> vector<1x256xf32>
      %c14_i32_51 = arith.constant 14 : i32
      %146 = vector.broadcast %c14_i32_51 : i32 to vector<1x256xi32>
      %147 = arith.cmpi sle, %32, %146 : vector<1x256xi32>
      %cst_52 = arith.constant 0.000000e+00 : f32
      %148 = vector.broadcast %cst_52 : f32 to vector<1x256xf32>
      %149 = arith.select %147, %145, %148 : vector<1x256xi1>, vector<1x256xf32>
      %c8 = arith.constant 8 : index
      %150 = memref.load %arg2[%c8] : memref<18xf32, #tpu.memory_space<smem>>
      %151 = vector.broadcast %150 : f32 to vector<1x256xf32>
      %152 = arith.mulf %151, %149 : vector<1x256xf32>
      %153 = arith.addf %144, %152 : vector<1x256xf32>
      %c1_i32_53 = arith.constant 1 : i32
      %154 = tpu.dynamic_rotate %15 by %c1_i32_53 dim 1 : vector<1x256xf32>, i32 -> vector<1x256xf32>
      %c1_i32_54 = arith.constant 1 : i32
      %155 = vector.broadcast %c1_i32_54 : i32 to vector<1x256xi32>
      %156 = arith.cmpi sge, %32, %155 : vector<1x256xi32>
      %cst_55 = arith.constant 0.000000e+00 : f32
      %157 = vector.broadcast %cst_55 : f32 to vector<1x256xf32>
      %158 = arith.select %156, %154, %157 : vector<1x256xi1>, vector<1x256xf32>
      %c15 = arith.constant 15 : index
      %159 = memref.load %arg2[%c15] : memref<18xf32, #tpu.memory_space<smem>>
      %160 = vector.broadcast %159 : f32 to vector<1x256xf32>
      %161 = arith.mulf %160, %158 : vector<1x256xf32>
      %162 = arith.addf %153, %161 : vector<1x256xf32>
      %c16 = arith.constant 16 : index
      %163 = memref.load %arg2[%c16] : memref<18xf32, #tpu.memory_space<smem>>
      %164 = vector.broadcast %163 : f32 to vector<1x256xf32>
      %165 = arith.mulf %164, %15 : vector<1x256xf32>
      %166 = arith.addf %162, %165 : vector<1x256xf32>
      %c255_i32_56 = arith.constant 255 : i32
      %167 = tpu.dynamic_rotate %15 by %c255_i32_56 dim 1 : vector<1x256xf32>, i32 -> vector<1x256xf32>
      %c14_i32_57 = arith.constant 14 : i32
      %168 = vector.broadcast %c14_i32_57 : i32 to vector<1x256xi32>
      %169 = arith.cmpi sle, %32, %168 : vector<1x256xi32>
      %cst_58 = arith.constant 0.000000e+00 : f32
      %170 = vector.broadcast %cst_58 : f32 to vector<1x256xf32>
      %171 = arith.select %169, %167, %170 : vector<1x256xi1>, vector<1x256xf32>
      %c17 = arith.constant 17 : index
      %172 = memref.load %arg2[%c17] : memref<18xf32, #tpu.memory_space<smem>>
      %173 = vector.broadcast %172 : f32 to vector<1x256xf32>
      %174 = arith.mulf %173, %171 : vector<1x256xf32>
      %175 = arith.addf %166, %174 : vector<1x256xf32>
      %c240_i32 = arith.constant 240 : i32
      %176 = tpu.dynamic_rotate %175 by %c240_i32 dim 1 : vector<1x256xf32>, i32 -> vector<1x256xf32>
      %c240_i32_59 = arith.constant 240 : i32
      %177 = vector.broadcast %c240_i32_59 : i32 to vector<1x256xi32>
      %178 = arith.cmpi slt, %16, %177 : vector<1x256xi32>
      %cst_60 = arith.constant 0.000000e+00 : f32
      %179 = vector.broadcast %cst_60 : f32 to vector<1x256xf32>
      %180 = arith.select %178, %176, %179 : vector<1x256xi1>, vector<1x256xf32>
      %181 = arith.addf %130, %180 : vector<1x256xf32>
      %182 = arith.negf %181 : vector<1x256xf32>
      %183 = math.exp %182 : vector<1x256xf32>
      %cst_61 = arith.constant 1.000000e+00 : f32
      %184 = vector.broadcast %cst_61 : f32 to vector<1x256xf32>
      %185 = arith.addf %184, %183 : vector<1x256xf32>
      %186 = arith.divf %184, %185 : vector<1x256xf32>
      %c0_62 = arith.constant 0 : index
      %c0_63 = arith.constant 0 : index
      %c0_64 = arith.constant 0 : index
      %187 = vector.load %arg4[%c0_62, %c0_63, %c0_64] : memref<1x1x256xf32, #tpu.memory_space<vmem>>, vector<1x1x256xf32>
      %188 = vector.shape_cast %187 : vector<1x1x256xf32> to vector<1x256xf32>
      %189 = vector.shape_cast %186 : vector<1x256xf32> to vector<1x1x256xf32>
      tpu.vector_store %arg4[%c0_62, %c0_63, %c0_64], %189 {strides = array<i32>} : memref<1x1x256xf32, #tpu.memory_space<vmem>>, vector<1x1x256xf32>,
    } else {
    }
    return
  }
  func.func @transform_0(%arg0: i32, %arg1: i32) -> i32 {
    %c0_i32 = arith.constant 0 : i32
    %c0_i32_0 = arith.constant 0 : i32
    return %c0_i32 : i32
  }
  func.func @transform_1(%arg0: i32, %arg1: i32) -> (i32, i32, i32) {
    %c0_i32 = arith.constant 0 : i32
    %c0_i32_0 = arith.constant 0 : i32
    return %arg0, %arg1, %c0_i32 : i32, i32, i32
  }
  func.func @transform_2(%arg0: i32, %arg1: i32) -> (i32, i32, i32) {
    %c0_i32 = arith.constant 0 : i32
    %c0_i32_0 = arith.constant 0 : i32
    %c0_i32_1 = arith.constant 0 : i32
    return %arg0, %c0_i32, %c0_i32_0 : i32, i32, i32
  }
}

</mosaic_0001>

<llo_original>
// kernel: tpu_custom_call.1
$region0: #{tpu_custom_call.1}
  #allocation0 [shape = 'u32[]', space=smem, size = 0x4, offset = 0x4, fixed_abs, tag = 'smem constant byte address 0x4 - core index']
  #allocation1 [shape = 'u32[144,128]{1,0:T(1,128)}', space=vmem, size = 0x12000, scoped, tag = 'internal scratch']
  #allocation2 [shape = 'f32[1,256]{1,0:T(1,128)}', space=vmem, size = 0x400, scoped, tag = 'scratch operand']
  #allocation3 [shape = 'f32[1,256]{1,0:T(1,128)}', space=vmem, size = 0x400, scoped, tag = 'scratch operand']
  %s0 = inlined_call_operand.hbm [shape: f32[18], index: 0, kind: input, shape index: {}]
  %s1 = inlined_call_operand.hbm [shape: f32[2,4,256], index: 1, kind: input, shape index: {}]
  %s2 = inlined_call_operand.hbm [shape: f32[2,1,256], index: 2, kind: output, shape index: {}]
  %s3 = sld [smem:[#allocation0]]
  $region61: #{tpu_custom_call.1} parent=0
    _
  %s5 = ssub.s32 1, %s3
  %s6 = scalar_select 0, %s5, %s3
  $region1: #{tpu_custom_call.1} parent=0
    #allocation4 [shape = 'u8[512]{0}', space=smem, size = 0x200, scoped, tag = 'input window, operand 0, single buffered']
    #allocation5 [shape = 's32[2]{0}', space=sflag, size = 0x8, scoped, tag = 'scoped memory for tpu_custom_call.1']
    #allocation6 [shape = 's32[2]{0}', space=sflag, size = 0x8, scoped, tag = 'scoped memory for tpu_custom_call.1']
    #allocation7 [shape = 's32[2]{0}', space=sflag, size = 0x8, scoped, tag = 'scoped memory for tpu_custom_call.1']
    #allocation8 [shape = 'u8[8192]{0}', space=vmem, size = 0x2000, scoped, tag = 'input window, operand 1']
    #allocation9 [shape = 'u8[2048]{0}', space=vmem, size = 0x800, scoped, tag = 'output window, operand 0']
    %7 = vsyncpa [#allocation7], 0
    %8 = vsyncpa [#allocation5], 0
    %s9 = scalar_lea.sflag [#allocation5], 1
    %10 = vsyncpa %s9, 0
    %11 = vsyncpa [#allocation6], 0
    %s12 = scalar_lea.sflag [#allocation6], 1
    %13 = vsyncpa %s12, 0
    loop: start=0, step=1, limit=4
    $region2: #{tpu_custom_call.1} parent=1 // loop_pre_header
      _
    $region3: #{tpu_custom_call.1} parent=1 // loop_header
      %s15 = sphi 0, %s19
      %p16 = scmp.ge.s32.totalorder %s15, 4
      %s22 = sphi 0, %s34
      %s23 = sphi 0, %s30
      %s24 = sphi 0, %s22
      %s25 = sphi 0, %s23
      %s26 = sphi 0, %s24
      %s27 = sphi 0, %s25
      %s35 = sphi 0, %s35
      %s37 = sphi 0, %s35
      %s38 = sphi 0, %s37
      %s52 = sphi 0, %s38
      %s60 = sphi 0, %s62
      %s63 = sphi 0, %s60
      %s64 = sphi 0, %s63
      %s80 = sphi 0, %s64
      %s86 = sphi 0, %s88
      %s89 = sphi 0, %s86
      %s90 = sphi 0, %s89
      %s106 = sphi 0, %s90
    $region4: #{tpu_custom_call.1} parent=1 // loop_header_branch
      %18 = sbr.rel (%p16) target = $region8
    $region5: #{tpu_custom_call.1} parent=1 // loop_body
      %s20 = ssub.s32 %s15, 1
      %s21 = ssub.s32 %s15, 2
      %s28 = sadd.s32 1, %s23
      %p29 = scmp.ge.s32.totalorder %s28, 1
      %s30 = scalar_select %p29, 0, %s28
      %s31 = sadd.s32 1, %s22
      %s32 = scalar_select %p29, %s31, %s22
      %p33 = scmp.ge.s32.totalorder %s32, 2
      %s34 = scalar_select %p33, 0, %s32
      %s36 = sadd.s32 %s35, 1
      %p39 = scmp.eq.s32.totalorder %s15, 1
      %p40 = scmp.ne.s32.totalorder %s35, %s37
      %p41 = scmp.eq.s32.totalorder %s15, 0
      %p42 = por %p40, %p41
      %p43 = scmp.ne.s32.totalorder %s35, %s37
      %p44 = scmp.eq.s32.totalorder %s20, 1
      %p45 = por %p43, %p44
      %p46 = scmp.ne.s32.totalorder %s37, %s38
      %p47 = scmp.eq.s32.totalorder %s20, 0
      %p48 = por %p46, %p47
      %p49 = scmp.ne.s32.totalorder %s37, %s38
      %p50 = scmp.eq.s32.totalorder %s21, 1
      %p51 = por %p49, %p50
      %p53 = scmp.ne.s32.totalorder %s38, %s52
      %p54 = scmp.eq.s32.totalorder %s21, 0
      %p55 = por %p53, %p54
      %s56 = ssub.s32 %s22, %s34
      %s57 = ssub.s32 %s23, %s30
      %s58 = sor.u32 %s56, %s57
      %p59 = scmp.eq.s32.totalorder %s58, 0
      %s61 = sadd.s32 %s60, 1
      %s62 = scalar_select %p59, %s60, %s61
      %p65 = pneg %p59
      %p66 = scmp.eq.s32.totalorder %s15, 1
      %p67 = por %p65, %p66
      %p68 = scmp.ne.s32.totalorder %s60, %s63
      %p69 = scmp.eq.s32.totalorder %s15, 0
      %p70 = por %p68, %p69
      %p71 = scmp.ne.s32.totalorder %s60, %s63
      %p72 = scmp.eq.s32.totalorder %s20, 1
      %p73 = por %p71, %p72
      %p74 = scmp.ne.s32.totalorder %s63, %s64
      %p75 = scmp.eq.s32.totalorder %s20, 0
      %p76 = por %p74, %p75
      %p77 = scmp.ne.s32.totalorder %s63, %s64
      %p78 = scmp.eq.s32.totalorder %s21, 1
      %p79 = por %p77, %p78
      %p81 = scmp.ne.s32.totalorder %s64, %s80
      %p82 = scmp.eq.s32.totalorder %s21, 0
      %p83 = por %p81, %p82
      %s84 = ssub.s32 %s22, %s34
      %p85 = scmp.eq.s32.totalorder %s84, 0
      %s87 = sadd.s32 %s86, 1
      %s88 = scalar_select %p85, %s86, %s87
      %p91 = pneg %p85
      %p92 = scmp.eq.s32.totalorder %s15, 1
      %p93 = por %p91, %p92
      %p94 = scmp.ne.s32.totalorder %s86, %s89
      %p95 = scmp.eq.s32.totalorder %s15, 0
      %p96 = por %p94, %p95
      %p97 = scmp.ne.s32.totalorder %s86, %s89
      %p98 = scmp.eq.s32.totalorder %s20, 1
      %p99 = por %p97, %p98
      %p100 = scmp.ne.s32.totalorder %s89, %s90
      %p101 = scmp.eq.s32.totalorder %s20, 0
      %p102 = por %p100, %p101
      %p103 = scmp.ne.s32.totalorder %s89, %s90
      %p104 = scmp.eq.s32.totalorder %s21, 1
      %p105 = por %p103, %p104
      %p107 = scmp.ne.s32.totalorder %s90, %s106
      %p108 = scmp.eq.s32.totalorder %s21, 0
      %p109 = por %p107, %p108
      %p110 = scmp.le.s32.totalorder 1, %s15
      %p111 = scmp.lt.s32.totalorder %s15, 3
      %p112 = pnand %p110, %p111
      %p113 = pneg %p112
      // Predicated region
      $region9: #{tpu_custom_call.1} parent=5 // pred_check
        _
      $region10: #{tpu_custom_call.1} parent=5 // pred_check_branch
        %115 = sbr.rel (%p112) target = $region12
      $region11: #{tpu_custom_call.1} parent=5 // pred_region
        %s116 = ssub.s32 %s15, 1
        // Predicated region
        $region13: #{tpu_custom_call.1} parent=11 // pred_check
          %p117 = pneg %p48
        $region14: #{tpu_custom_call.1} parent=11 // pred_check_branch
          %119 = sbr.rel (%p117) target = $region16
        $region15: #{tpu_custom_call.1} parent=11 // pred_region
          %s121 = ssub.s32 16, 16
          %122 = vsyncadd [#allocation7], %s121
          %125 = dma.hbm_to_smem %s0, 16, [#allocation4], [#allocation7]
        $region16: #{tpu_custom_call.1} parent=11 // pred_fallthru
          _
      $region12: #{tpu_custom_call.1} parent=5 // pred_fallthru
        _
      %p126 = scmp.lt.s32.totalorder %s15, 2
      // Predicated region
      $region17: #{tpu_custom_call.1} parent=5 // pred_check
        %p127 = pneg %p126
      $region18: #{tpu_custom_call.1} parent=5 // pred_check_branch
        %129 = sbr.rel (%p127) target = $region20
      $region19: #{tpu_custom_call.1} parent=5 // pred_region
        // Predicated region
        $region21: #{tpu_custom_call.1} parent=19 // pred_check
          %p130 = pneg %p70
        $region22: #{tpu_custom_call.1} parent=19 // pred_check_branch
          %132 = sbr.rel (%p130) target = $region24
        $region23: #{tpu_custom_call.1} parent=19 // pred_region
          %s133 = sand.u32 %s60, 1
          %s134 = scalar_lea.sflag [#allocation5], %s133
          %s135 = sand.u32 %s60, 1
          %s136 = smul.addr %s135, 8
          %s137 = scalar_lea.vmem [#allocation8], %s136
          %s139 = ssub.s32 128, 128
          %140 = vsyncadd %s134, %s139
          %s141 = smul.addr %s23, 2
          %s142 = smul.addr %s22, 2
          %s143 = sadd.s32 %s141, %s142
          %s144 = smul.addr %s143, 64
          %s145 = scalar_lea.hbm %s1, %s144
          %s147 = sshll.u32 %s137, 4
          %s148 = int_to_ptr.vmem [resolvable:$true] %s147
          %150 = dma.hbm_to_vmem [thread:$0]  %s145, 128, %s148, %s134
        $region24: #{tpu_custom_call.1} parent=19 // pred_fallthru
          _
      $region20: #{tpu_custom_call.1} parent=5 // pred_fallthru
        _
      %p151 = scmp.le.s32.totalorder 1, %s15
      %p152 = scmp.lt.s32.totalorder %s15, 3
      %p153 = pnand %p151, %p152
      %p154 = pneg %p153
      // Predicated region
      $region25: #{tpu_custom_call.1} parent=5 // pred_check
        _
      $region26: #{tpu_custom_call.1} parent=5 // pred_check_branch
        %156 = sbr.rel (%p153) target = $region28
      $region27: #{tpu_custom_call.1} parent=5 // pred_region
        %s157 = ssub.s32 %s15, 1
        // Predicated region
        $region29: #{tpu_custom_call.1} parent=27 // pred_check
          %p158 = pneg %p48
        $region30: #{tpu_custom_call.1} parent=27 // pred_check_branch
          %160 = sbr.rel (%p158) target = $region32
        $region31: #{tpu_custom_call.1} parent=27 // pred_region
          %161 = dma.done [#allocation7], 16
        $region32: #{tpu_custom_call.1} parent=27 // pred_fallthru
          _
        %s162 = sand.u32 %s63, 1
        %s163 = scalar_lea.sflag [#allocation5], %s162
        %s164 = sand.u32 %s63, 1
        %s165 = smul.addr %s164, 8
        %s166 = scalar_lea.vmem [#allocation8], %s165
        // Predicated region
        $region33: #{tpu_custom_call.1} parent=27 // pred_check
          %p167 = pneg %p76
        $region34: #{tpu_custom_call.1} parent=27 // pred_check_branch
          %169 = sbr.rel (%p167) target = $region36
        $region35: #{tpu_custom_call.1} parent=27 // pred_region
          %170 = dma.done %s163, 128
        $region36: #{tpu_custom_call.1} parent=27 // pred_fallthru
          _
        %171 = sfence
        %p172 = pneg %p48
        %p173 = pneg %p45
        %s174 = sand.u32 %s63, 1
        %s175 = scalar_lea.sflag [#allocation5], %s174
        %s176 = sand.u32 %s63, 1
        %s177 = smul.addr %s176, 8
        %s178 = scalar_lea.vmem [#allocation8], %s177
        %p179 = pneg %p76
        %p180 = pneg %p73
        %p181 = pneg %p102
        %p182 = pneg %p99
        %s183 = sand.u32 %s89, 1
        %s184 = scalar_lea.sflag [#allocation6], %s183
        %s185 = sand.u32 %s89, 1
        %s186 = smul.addr %s185, 2
        %s187 = scalar_lea.vmem [#allocation9], %s186
        %v188 = vld [vmem:[%s166] sm:$0xff]
        %v190 = vcombine.high %v188, %v188
        %vm192 = vcmask 1043456
        %v193 = vsel %vm192, %v188, 0.0
        %v194 = vrot.slane %v193, 4
        %v195 = vadd.f32 %v193, %v194
        %v196 = vrot.slane %v195, 2
        %v197 = vadd.f32 %v195, %v196
        %v198 = vrot.slane %v197, 1
        %v199 = vadd.f32 %v197, %v198
        %v200 = vsel %vm192, %v190, 0.0
        %v201 = vrot.slane %v200, 4
        %v202 = vadd.f32 %v200, %v201
        %v203 = vrot.slane %v202, 2
        %v204 = vadd.f32 %v202, %v203
        %v205 = vrot.slane %v204, 1
        %v206 = vadd.f32 %v204, %v205
        %v207 = vsel %vm192, %v188, -inf
        %v208 = vrot.slane %v207, 4
        %v209 = vmax.f32 %v207, %v208
        %v210 = vrot.slane %v209, 2
        %v211 = vmax.f32 %v209, %v210
        %v212 = vrot.slane %v211, 1
        %v213 = vmax.f32 %v211, %v212
        %v214 = vsel %vm192, %v190, -inf
        %v215 = vrot.slane %v214, 4
        %v216 = vmax.f32 %v214, %v215
        %v217 = vrot.slane %v216, 2
        %v218 = vmax.f32 %v216, %v217
        %v219 = vrot.slane %v218, 1
        %v220 = vmax.f32 %v218, %v219
        %p221 = scmp.eq.s32.totalorder %s25, 0
        // Predicated region
        $region37: #{tpu_custom_call.1} parent=27 // pred_check
          %p222 = pneg %p221
        $region38: #{tpu_custom_call.1} parent=27 // pred_check_branch
          %224 = sbr.rel (%p222) target = $region40
        $region39: #{tpu_custom_call.1} parent=27 // pred_region
          %v227 = vcombine.low %v199, %v206
          %v229 = vunpack.c.l.s4 1966171168
          %v230 = vunpack.c.0.s8 %v229
          %v231 = vlaneseq
          %v232 = vshrl.u32 %v231, 7
          %v233 = vsub.s32 %v230, %v232
          %v234 = vrot.slane %v227, %v233
          %v236 = vunpack.c.l.s4 1966171168
          %v237 = vunpack.c.0.s8 %v236
          %v238 = vlaneseq
          %v239 = vshrl.u32 %v238, 7
          %v240 = vsub.s32 %v237, %v239
          %v241 = vrot.slane %v234, %v240
          %v243 = vlaneseq
          %vm244 = vcmp.ge.s32.totalorder %v243, 0
          %vm245 = vcmp.lt.s32.totalorder %v243, 256
          %vm246 = vmand %vm244, %vm245
          %247 = vst.msk [vmem:[#allocation2] sm:$0x3] %vm246, %v241
          %v250 = vcombine.low %v213, %v220
          %v252 = vunpack.c.l.s4 1966171168
          %v253 = vunpack.c.0.s8 %v252
          %v254 = vlaneseq
          %v255 = vshrl.u32 %v254, 7
          %v256 = vsub.s32 %v253, %v255
          %v257 = vrot.slane %v250, %v256
          %v259 = vunpack.c.l.s4 1966171168
          %v260 = vunpack.c.0.s8 %v259
          %v261 = vlaneseq
          %v262 = vshrl.u32 %v261, 7
          %v263 = vsub.s32 %v260, %v262
          %v264 = vrot.slane %v257, %v263
          %266 = vst.msk [vmem:[#allocation3] sm:$0x3] %vm246, %v264
        $region40: #{tpu_custom_call.1} parent=27 // pred_fallthru
          _
        %p267 = scmp.gt.s32.totalorder %s25, 0
        // Predicated region
        $region41: #{tpu_custom_call.1} parent=27 // pred_check
          %p268 = pneg %p267
        $region42: #{tpu_custom_call.1} parent=27 // pred_check_branch
          %270 = sbr.rel (%p268) target = $region44
        $region43: #{tpu_custom_call.1} parent=27 // pred_region
          %v271 = vld [vmem:[#allocation2] sm:$0x3]
          %v274 = vcombine.low %v199, %v206
          %v276 = vunpack.c.l.s4 1966171168
          %v277 = vunpack.c.0.s8 %v276
          %v278 = vlaneseq
          %v279 = vshrl.u32 %v278, 7
          %v280 = vsub.s32 %v277, %v279
          %v281 = vrot.slane %v274, %v280
          %v283 = vunpack.c.l.s4 1966171168
          %v284 = vunpack.c.0.s8 %v283
          %v285 = vlaneseq
          %v286 = vshrl.u32 %v285, 7
          %v287 = vsub.s32 %v284, %v286
          %v288 = vrot.slane %v281, %v287
          %v290 = vadd.f32 %v271, %v288
          %v291 = vlaneseq
          %vm292 = vcmp.ge.s32.totalorder %v291, 0
          %vm293 = vcmp.lt.s32.totalorder %v291, 256
          %vm294 = vmand %vm292, %vm293
          %295 = vst.msk [vmem:[#allocation2] sm:$0x3] %vm294, %v290
          %v296 = vld [vmem:[#allocation3] sm:$0x3]
          %v299 = vcombine.low %v213, %v220
          %v301 = vunpack.c.l.s4 1966171168
          %v302 = vunpack.c.0.s8 %v301
          %v303 = vlaneseq
          %v304 = vshrl.u32 %v303, 7
          %v305 = vsub.s32 %v302, %v304
          %v306 = vrot.slane %v299, %v305
          %v308 = vunpack.c.l.s4 1966171168
          %v309 = vunpack.c.0.s8 %v308
          %v310 = vlaneseq
          %v311 = vshrl.u32 %v310, 7
          %v312 = vsub.s32 %v309, %v311
          %v313 = vrot.slane %v306, %v312
          %v315 = vmax.f32 %v296, %v313
          %316 = vst.msk [vmem:[#allocation3] sm:$0x3] %vm294, %v315
        $region44: #{tpu_custom_call.1} parent=27 // pred_fallthru
          _
        // Predicated region
        $region45: #{tpu_custom_call.1} parent=27 // pred_check
          %p317 = pneg %p221
        $region46: #{tpu_custom_call.1} parent=27 // pred_check_branch
          %319 = sbr.rel (%p317) target = $region48
        $region47: #{tpu_custom_call.1} parent=27 // pred_region
          %v320 = vld [vmem:[#allocation2] sm:$0x3]
          %v321 = vmul.f32 %v320, 0.25
          %v322 = vld [vmem:[#allocation3] sm:$0x3]
          %v323 = vlaneseq
          %v324 = vand.u32 %v323, 127
          %v325 = vadd.s32 %v324, 128
          %vm326 = vcmp.lt.s32.totalorder %v324, 0
          %v327 = vsub.s32 0, %v324
          %v328 = vsel %vm326, %v327, %v324
          %v329 = vshrl.u32 %v328, 4
          %v330 = vand.u32 %v328, 15
          %v331 = vsub.s32 0, %v330
          %v332 = vsel %vm326, %v331, %v330
          %vm333 = vcmp.lt.s32.totalorder %v325, 0
          %v334 = vsub.s32 0, %v325
          %v335 = vsel %vm333, %v334, %v325
          %v336 = vshrl.u32 %v335, 4
          %v337 = vand.u32 %v335, 15
          %v338 = vsub.s32 0, %v337
          %v339 = vsel %vm333, %v338, %v337
          %vm340 = vcmp.ne.s32.totalorder %v332, 0
          %vm341 = vcmp.ne.s32.totalorder %v339, 0
          %vm342 = vcmp.lt.s32.totalorder %v332, 0
          %vm343 = vcmp.lt.s32.totalorder %v339, 0
          %vm344 = vmand %vm342, %vm340
          %vm345 = vmand %vm343, %vm341
          %v346 = vadd.s32 %v332, 16
          %v347 = vadd.s32 %v339, 16
          %v348 = vsel %vm344, %v346, %v332
          %v349 = vsel %vm345, %v347, %v339
          %v351 = vlaneseq
          %v352 = vshrl.u32 %v351, 7
          %v353 = vsub.s32 0, %v352
          %v354 = vrot.slane %v321, %v353
          %v355 = vlaneseq
          %v356 = vshrl.u32 %v355, 7
          %v357 = vsub.s32 1, %v356
          %v358 = vrot.slane %v321, %v357
          %361 = vrot.lane.b32.xlu0 %v354, 1
          %v362 = vpop.permute.xlu0 %361
          %363 = vrot.lane.b32.xlu0 %v358, 1
          %v364 = vpop.permute.xlu0 %363
          %vm365 = vcmp.lt.s32.totalorder %v324, 1
          %v366 = vsel %vm365, %v362, %v364
          %v367 = vsel %vm365, %v364, %v362
          %vm368 = vcmp.ge.s32.totalorder %v348, 1
          %vm369 = vcmp.ge.s32.totalorder %v349, 1
          %v370 = vsel %vm368, %v367, 0.0
          %v371 = vsel %vm369, %v366, 0.0
          %s372 = sld [smem:[#allocation4]]
          %v373 = vstv %s372
          %v374 = vmul.f32 %v373, %v370
          %v375 = vmul.f32 %v373, %v371
          %v376 = vadd.f32 %v374, 0.0
          %v377 = vadd.f32 %v375, 0.0
          %s378 = sld [smem:[#allocation4 + $0x1]]
          %v379 = vstv %s378
          %v380 = vmul.f32 %v379, %v321
          %v382 = vlaneseq
          %v383 = vshrl.u32 %v382, 7
          %v384 = vsub.s32 0, %v383
          %v385 = vrot.slane %v380, %v384
          %v386 = vlaneseq
          %v387 = vshrl.u32 %v386, 7
          %v388 = vsub.s32 1, %v387
          %v389 = vrot.slane %v380, %v388
          %v392 = vadd.f32 %v376, %v385
          %v393 = vadd.f32 %v377, %v389
          %394 = vrot.lane.b32.xlu0 %v354, 127
          %v395 = vpop.permute.xlu0 %394
          %396 = vrot.lane.b32.xlu0 %v358, 127
          %v397 = vpop.permute.xlu0 %396
          %vm398 = vcmp.lt.s32.totalorder %v324, 127
          %v399 = vsel %vm398, %v395, %v397
          %v400 = vsel %vm398, %v397, %v395
          %vm401 = vcmp.le.s32.totalorder %v348, 14
          %vm402 = vcmp.le.s32.totalorder %v349, 14
          %v403 = vsel %vm401, %v399, 0.0
          %v404 = vsel %vm402, %v400, 0.0
          %s405 = sld [smem:[#allocation4 + $0x2]]
          %v406 = vstv %s405
          %v407 = vmul.f32 %v406, %v403
          %v408 = vmul.f32 %v406, %v404
          %v409 = vadd.f32 %v392, %v407
          %v410 = vadd.f32 %v393, %v408
          %v412 = vlaneseq
          %v413 = vshrl.u32 %v412, 7
          %v414 = vsub.s32 0, %v413
          %v415 = vrot.slane %v322, %v414
          %v416 = vlaneseq
          %v417 = vshrl.u32 %v416, 7
          %v418 = vsub.s32 1, %v417
          %v419 = vrot.slane %v322, %v418
          %422 = vrot.lane.b32.xlu0 %v415, 1
          %v423 = vpop.permute.xlu0 %422
          %424 = vrot.lane.b32.xlu0 %v419, 1
          %v425 = vpop.permute.xlu0 %424
          %v426 = vsel %vm365, %v423, %v425
          %v427 = vsel %vm365, %v425, %v423
          %v428 = vsel %vm368, %v427, 0.0
          %v429 = vsel %vm369, %v426, 0.0
          %s430 = sld [smem:[#allocation4 + $0x9]]
          %v431 = vstv %s430
          %v432 = vmul.f32 %v431, %v428
          %v433 = vmul.f32 %v431, %v429
          %v434 = vadd.f32 %v409, %v432
          %v435 = vadd.f32 %v410, %v433
          %s436 = sld [smem:[#allocation4 + $0xa]]
          %v437 = vstv %s436
          %v438 = vmul.f32 %v437, %v322
          %v440 = vlaneseq
          %v441 = vshrl.u32 %v440, 7
          %v442 = vsub.s32 0, %v441
          %v443 = vrot.slane %v438, %v442
          %v444 = vlaneseq
          %v445 = vshrl.u32 %v444, 7
          %v446 = vsub.s32 1, %v445
          %v447 = vrot.slane %v438, %v446
          %v450 = vadd.f32 %v434, %v443
          %v451 = vadd.f32 %v435, %v447
          %452 = vrot.lane.b32.xlu0 %v415, 127
          %v453 = vpop.permute.xlu0 %452
          %454 = vrot.lane.b32.xlu0 %v419, 127
          %v455 = vpop.permute.xlu0 %454
          %v456 = vsel %vm398, %v453, %v455
          %v457 = vsel %vm398, %v455, %v453
          %v458 = vsel %vm401, %v456, 0.0
          %v459 = vsel %vm402, %v457, 0.0
          %s460 = sld [smem:[#allocation4 + $0xb]]
          %v461 = vstv %s460
          %v462 = vmul.f32 %v461, %v458
          %v463 = vmul.f32 %v461, %v459
          %v464 = vadd.f32 %v450, %v462
          %v465 = vadd.f32 %v451, %v463
          %466 = vrot.lane.b32.xlu0 %v464, 16
          %v467 = vpop.permute.xlu0 %466
          %468 = vrot.lane.b32.xlu0 %v465, 16
          %v469 = vpop.permute.xlu0 %468
          %vm470 = vcmp.lt.s32.totalorder %v324, 16
          %v471 = vsel %vm470, %v467, %v469
          %v472 = vsel %vm470, %v469, %v467
          %vm473 = vcmp.ge.s32.totalorder %v324, 16
          %vm474 = vcmp.ge.s32.totalorder %v325, 16
          %v475 = vsel %vm473, %v472, 0.0
          %v476 = vsel %vm474, %v471, 0.0
          %v477 = vadd.f32 %v475, 0.0
          %v478 = vadd.f32 %v476, 0.0
          %s479 = sld [smem:[#allocation4 + $0x3]]
          %v480 = vstv %s479
          %v481 = vmul.f32 %v480, %v370
          %v482 = vmul.f32 %v480, %v371
          %v483 = vadd.f32 %v481, 0.0
          %v484 = vadd.f32 %v482, 0.0
          %s485 = sld [smem:[#allocation4 + $0x4]]
          %v486 = vstv %s485
          %v487 = vmul.f32 %v486, %v321
          %v489 = vlaneseq
          %v490 = vshrl.u32 %v489, 7
          %v491 = vsub.s32 0, %v490
          %v492 = vrot.slane %v487, %v491
          %v493 = vlaneseq
          %v494 = vshrl.u32 %v493, 7
          %v495 = vsub.s32 1, %v494
          %v496 = vrot.slane %v487, %v495
          %v499 = vadd.f32 %v483, %v492
          %v500 = vadd.f32 %v484, %v496
          %s501 = sld [smem:[#allocation4 + $0x5]]
          %v502 = vstv %s501
          %v503 = vmul.f32 %v502, %v403
          %v504 = vmul.f32 %v502, %v404
          %v505 = vadd.f32 %v499, %v503
          %v506 = vadd.f32 %v500, %v504
          %s507 = sld [smem:[#allocation4 + $0xc]]
          %v508 = vstv %s507
          %v509 = vmul.f32 %v508, %v428
          %v510 = vmul.f32 %v508, %v429
          %v511 = vadd.f32 %v505, %v509
          %v512 = vadd.f32 %v506, %v510
          %s513 = sld [smem:[#allocation4 + $0xd]]
          %v514 = vstv %s513
          %v515 = vmul.f32 %v514, %v322
          %v517 = vlaneseq
          %v518 = vshrl.u32 %v517, 7
          %v519 = vsub.s32 0, %v518
          %v520 = vrot.slane %v515, %v519
          %v521 = vlaneseq
          %v522 = vshrl.u32 %v521, 7
          %v523 = vsub.s32 1, %v522
          %v524 = vrot.slane %v515, %v523
          %v527 = vadd.f32 %v511, %v520
          %v528 = vadd.f32 %v512, %v524
          %s529 = sld [smem:[#allocation4 + $0xe]]
          %v530 = vstv %s529
          %v531 = vmul.f32 %v530, %v458
          %v532 = vmul.f32 %v530, %v459
          %v533 = vadd.f32 %v527, %v531
          %v534 = vadd.f32 %v528, %v532
          %v535 = vadd.f32 %v477, %v533
          %v536 = vadd.f32 %v478, %v534
          %s537 = sld [smem:[#allocation4 + $0x6]]
          %v538 = vstv %s537
          %v539 = vmul.f32 %v538, %v370
          %v540 = vmul.f32 %v538, %v371
          %v541 = vadd.f32 %v539, 0.0
          %v542 = vadd.f32 %v540, 0.0
          %s543 = sld [smem:[#allocation4 + $0x7]]
          %v544 = vstv %s543
          %v545 = vmul.f32 %v544, %v321
          %v547 = vlaneseq
          %v548 = vshrl.u32 %v547, 7
          %v549 = vsub.s32 0, %v548
          %v550 = vrot.slane %v545, %v549
          %v551 = vlaneseq
          %v552 = vshrl.u32 %v551, 7
          %v553 = vsub.s32 1, %v552
          %v554 = vrot.slane %v545, %v553
          %v557 = vadd.f32 %v541, %v550
          %v558 = vadd.f32 %v542, %v554
          %s559 = sld [smem:[#allocation4 + $0x8]]
          %v560 = vstv %s559
          %v561 = vmul.f32 %v560, %v403
          %v562 = vmul.f32 %v560, %v404
          %v563 = vadd.f32 %v557, %v561
          %v564 = vadd.f32 %v558, %v562
          %s565 = sld [smem:[#allocation4 + $0xf]]
          %v566 = vstv %s565
          %v567 = vmul.f32 %v566, %v428
          %v568 = vmul.f32 %v566, %v429
          %v569 = vadd.f32 %v563, %v567
          %v570 = vadd.f32 %v564, %v568
          %s571 = sld [smem:[#allocation4 + $0x10]]
          %v572 = vstv %s571
          %v573 = vmul.f32 %v572, %v322
          %v575 = vlaneseq
          %v576 = vshrl.u32 %v575, 7
          %v577 = vsub.s32 0, %v576
          %v578 = vrot.slane %v573, %v577
          %v579 = vlaneseq
          %v580 = vshrl.u32 %v579, 7
          %v581 = vsub.s32 1, %v580
          %v582 = vrot.slane %v573, %v581
          %v585 = vadd.f32 %v569, %v578
          %v586 = vadd.f32 %v570, %v582
          %s587 = sld [smem:[#allocation4 + $0x11]]
          %v588 = vstv %s587
          %v589 = vmul.f32 %v588, %v458
          %v590 = vmul.f32 %v588, %v459
          %v591 = vadd.f32 %v585, %v589
          %v592 = vadd.f32 %v586, %v590
          %593 = vrot.lane.b32.xlu0 %v591, 112
          %v594 = vpop.permute.xlu0 %593
          %595 = vrot.lane.b32.xlu0 %v592, 112
          %v596 = vpop.permute.xlu0 %595
          %vm597 = vcmp.lt.s32.totalorder %v324, 112
          %v598 = vsel %vm597, %v594, %v596
          %v599 = vsel %vm597, %v596, %v594
          %vm600 = vcmp.lt.s32.totalorder %v324, 240
          %vm601 = vcmp.lt.s32.totalorder %v325, 240
          %v602 = vsel %vm600, %v598, 0.0
          %v603 = vsel %vm601, %v599, 0.0
          %v604 = vadd.f32 %v535, %v602
          %v605 = vadd.f32 %v536, %v603
          %v606 = vxor.u32 %v604, 2147483648
          %v607 = vxor.u32 %v605, 2147483648
          %v608 = vmul.f32 %v606, 1.442695
          %v609 = vpow.pop %v608
          %v610 = vmul.f32 %v607, 1.442695
          %v611 = vpow.pop %v610
          %v612 = vadd.f32 %v609, 1.0
          %v613 = vadd.f32 %v611, 1.0
          %v614 = vrcp.pop %v612
          %v615 = vmul.f32 1.0, %v614
          %v616 = vrcp.pop %v613
          %v617 = vmul.f32 1.0, %v616
          %v620 = vcombine.low %v615, %v617
          %v622 = vunpack.c.l.s4 1966171168
          %v623 = vunpack.c.0.s8 %v622
          %v624 = vlaneseq
          %v625 = vshrl.u32 %v624, 7
          %v626 = vsub.s32 %v623, %v625
          %v627 = vrot.slane %v620, %v626
          %v629 = vunpack.c.l.s4 1966171168
          %v630 = vunpack.c.0.s8 %v629
          %v631 = vlaneseq
          %v632 = vshrl.u32 %v631, 7
          %v633 = vsub.s32 %v630, %v632
          %v634 = vrot.slane %v627, %v633
          %v636 = vlaneseq
          %vm637 = vcmp.ge.s32.totalorder %v636, 0
          %vm638 = vcmp.lt.s32.totalorder %v636, 256
          %vm639 = vmand %vm637, %vm638
          %640 = vst.msk [vmem:[%s187] sm:$0x3] %vm639, %v634
        $region48: #{tpu_custom_call.1} parent=27 // pred_fallthru
          _
        %s641 = sand.u32 %s89, 1
        %s642 = scalar_lea.sflag [#allocation6], %s641
        %s643 = sand.u32 %s89, 1
        %s644 = smul.addr %s643, 2
        %s645 = scalar_lea.vmem [#allocation9], %s644
        // Predicated region
        $region49: #{tpu_custom_call.1} parent=27 // pred_check
          %p646 = pneg %p99
        $region50: #{tpu_custom_call.1} parent=27 // pred_check_branch
          %648 = sbr.rel (%p646) target = $region52
        $region51: #{tpu_custom_call.1} parent=27 // pred_region
          %s650 = ssub.s32 32, 32
          %651 = vsyncadd %s642, %s650
          %s652 = smul.addr %s24, 2
          %s653 = smul.addr %s652, 16
          %s654 = scalar_lea.hbm %s2, %s653
          %s656 = sshll.u32 %s645, 4
          %s657 = int_to_ptr.vmem [resolvable:$true] %s656
          %659 = dma.vmem_to_hbm [thread:$0]  %s657, 32, %s654, %s642
        $region52: #{tpu_custom_call.1} parent=27 // pred_fallthru
          _
      $region28: #{tpu_custom_call.1} parent=5 // pred_fallthru
        _
      %p660 = scmp.le.s32.totalorder 2, %s15
      // Predicated region
      $region53: #{tpu_custom_call.1} parent=5 // pred_check
        %p661 = pneg %p660
      $region54: #{tpu_custom_call.1} parent=5 // pred_check_branch
        %663 = sbr.rel (%p661) target = $region56
      $region55: #{tpu_custom_call.1} parent=5 // pred_region
        %s664 = ssub.s32 %s15, 2
        // Predicated region
        $region57: #{tpu_custom_call.1} parent=55 // pred_check
          %p665 = pneg %p105
        $region58: #{tpu_custom_call.1} parent=55 // pred_check_branch
          %667 = sbr.rel (%p665) target = $region60
        $region59: #{tpu_custom_call.1} parent=55 // pred_region
          %s668 = sand.u32 %s90, 1
          %s669 = scalar_lea.sflag [#allocation6], %s668
          %s670 = sand.u32 %s90, 1
          %s671 = smul.addr %s670, 2
          %s672 = scalar_lea.vmem [#allocation9], %s671
          %673 = dma.done %s669, 32
        $region60: #{tpu_custom_call.1} parent=55 // pred_fallthru
          _
      $region56: #{tpu_custom_call.1} parent=5 // pred_fallthru
        _
    $region6: #{tpu_custom_call.1} parent=1 // loop_footer
      %s19 = sadd.s32 1, %s15
    $region7: #{tpu_custom_call.1} parent=1 // loop_footer_branch
      %14 = sbr.rel target = $region3
    $region8: #{tpu_custom_call.1} parent=1 // loop_exit
      _
    %674 = vsyncpa [#allocation5], 1
    %s675 = scalar_lea.sflag [#allocation5], 1
    %676 = vsyncpa %s675, 1
    %677 = vsyncpa [#allocation6], 1
    %s678 = scalar_lea.sflag [#allocation6], 1
    %679 = vsyncpa %s678, 1
    %680 = vsyncpa [#allocation7], 1
    %s681 = scalar_lea.sflag [#allocation7], 1
    %682 = vsyncpa %s681, 1

</llo_original>
